<compile_context>
chip_gen: v7x
topology: tpu7x:2x2x1
jax: 0.10.0
libtpu: 0.0.40
codegen_flags: <defaults>
</compile_context>

<pallas_src>
import functools

import jax
import jax.numpy as jnp
from jax.experimental import pallas as pl
from jax.experimental.pallas import tpu as pltpu


def _round_up(n, m):
    return ((n + m - 1) // m) * m


def riiid_kernel(x_ref,
                 w1_ref, b1_ref,
                 w2_ref, b2_ref,
                 w3_ref, b3_ref,
                 w4_ref, b4_ref,
                 w5d_ref, b5d_ref,
                 o_ref):
    """Fused MLP forward for one batch tile (all weights resident in VMEM)."""

    def layer(h_bf16, w_ref, b_ref):
        # bf16 x bf16 -> f32 accumulation on the MXU; bias + ReLU in f32,
        # then cast back to bf16 for the next layer's MXU input.
        acc = jnp.dot(h_bf16, w_ref[...],
                      preferred_element_type=jnp.float32) + b_ref[...]
        return jnp.maximum(acc, 0.0).astype(jnp.bfloat16)

    h = x_ref[...].astype(jnp.bfloat16)
    h = layer(h, w1_ref, b1_ref)
    h = layer(h, w2_ref, b2_ref)
    h = layer(h, w3_ref, b3_ref)
    h = layer(h, w4_ref, b4_ref)

    # fc5 folded into the logit difference d = l1 - l0.
    # softmax([l0, l1]) == [sigmoid(l0 - l1), sigmoid(l1 - l0)] exactly, so the
    # whole tail is one exp (EUP) and one approximate reciprocal (EUP vrcp),
    # with no cross-lane reduction.
    d = jnp.dot(h, w5d_ref[...],
                preferred_element_type=jnp.float32) + b5d_ref[...]    # (tb, 1)
    p1 = pl.reciprocal(1.0 + jnp.exp(-d), approx=True)                # sigmoid(d)
    p0 = 1.0 - p1

    o_ref[:, 0:1] = p0.astype(o_ref.dtype)
    o_ref[:, 1:2] = p1.astype(o_ref.dtype)


@functools.partial(jax.jit, static_argnames=("nfeatures",))
def riiid_net_forward(x, params, *, nfeatures):
    """Wrapper: reshape like x.view(-1, NFEATURES), pad batch, call the kernel."""
    (w1, b1), (w2, b2), (w3, b3), (w4, b4), (w5, b5) = params

    x = x.reshape(-1, nfeatures)                       # x.view(-1, NFEATURES)
    batch = x.shape[0]

    # Batch tile: as large as possible (up to 512 rows) but capped so the grid
    # keeps >= 2 steps when the batch allows it (lets v7x use both TCs).
    TB_MAX = 512
    batch8 = _round_up(batch, 8)
    tb = max(8, min(TB_MAX, _round_up(batch8 // 2, 8)))
    batch_pad = _round_up(batch8, tb)
    if batch_pad != batch:
        x = jnp.pad(x, ((0, batch_pad - batch), (0, 0)))

    nhidden = w1.shape[1]

    # bf16 weights for the MXU (accumulation stays f32 in-kernel); biases f32.
    w1b = w1.astype(jnp.bfloat16)
    w2b = w2.astype(jnp.bfloat16)
    w3b = w3.astype(jnp.bfloat16)
    w4b = w4.astype(jnp.bfloat16)
    # fc5 reduced to the logit-difference column (exact softmax rewrite).
    w5d = (w5[:, 1:2] - w5[:, 0:1]).astype(jnp.bfloat16)   # (nhidden, 1)
    b5d = (b5[:, 1:2] - b5[:, 0:1])                         # (1, 1), f32

    grid = (batch_pad // tb,)

    def const_spec(shape):
        # Grid-invariant block: resident in VMEM across all batch tiles.
        return pl.BlockSpec(shape, lambda i: (0, 0))

    flops = 2 * batch_pad * (nfeatures * nhidden
                             + 3 * nhidden * nhidden
                             + nhidden * 1)
    bytes_accessed = (batch_pad * nfeatures * 4            # x (f32 in)
                      + batch_pad * 2 * 4                   # probs (f32 out)
                      + (nfeatures * nhidden + 3 * nhidden * nhidden
                         + nhidden) * 2                     # bf16 weights
                      + (4 * nhidden + 1) * 4)              # f32 biases

    out = pl.pallas_call(
        riiid_kernel,
        out_shape=jax.ShapeDtypeStruct((batch_pad, 2), jnp.float32),
        grid_spec=pltpu.PrefetchScalarGridSpec(
            num_scalar_prefetch=0,
            grid=grid,
            in_specs=[
                pl.BlockSpec((tb, nfeatures), lambda i: (i, 0)),            # x
                const_spec((nfeatures, nhidden)), const_spec((1, nhidden)),  # fc1
                const_spec((nhidden, nhidden)),   const_spec((1, nhidden)),  # fc2
                const_spec((nhidden, nhidden)),   const_spec((1, nhidden)),  # fc3
                const_spec((nhidden, nhidden)),   const_spec((1, nhidden)),  # fc4
                const_spec((nhidden, 1)),         const_spec((1, 1)),        # fc5 (diff)
            ],
            out_specs=pl.BlockSpec((tb, 2), lambda i: (i, 0)),
        ),
        compiler_params=pltpu.CompilerParams(
            dimension_semantics=("parallel",)),
        cost_estimate=pl.CostEstimate(
            flops=flops,
            transcendentals=batch_pad,
            bytes_accessed=bytes_accessed),
    )(x, w1b, b1, w2b, b2, w3b, b3, w4b, b4, w5d, b5d)

    return out[:batch]


def init_params(key, nfeatures, nhidden, nclasses=2):
    """Deterministic init mimicking nn.Linear defaults (U(-1/sqrt(fan_in), +)).

    Weights are stored transposed: W_t has shape [in, out].
    """
    dims = [(nfeatures, nhidden), (nhidden, nhidden), (nhidden, nhidden),
            (nhidden, nhidden), (nhidden, nclasses)]
    params = []
    for (fan_in, fan_out) in dims:
        key, kw, kb = jax.random.split(key, 3)
        bound = 1.0 / (fan_in ** 0.5)
        w_t = jax.random.uniform(kw, (fan_in, fan_out), jnp.float32,
                                 minval=-bound, maxval=bound)
        b = jax.random.uniform(kb, (1, fan_out), jnp.float32,
                               minval=-bound, maxval=bound)
        params.append((w_t, b))
    return params


def riiid_net_reference(x, params, nfeatures):
    """Plain-JAX f32 reference for correctness checking."""
    x = x.reshape(-1, nfeatures)
    (w1, b1), (w2, b2), (w3, b3), (w4, b4), (w5, b5) = params
    h = jnp.maximum(x @ w1 + b1, 0.0)
    h = jnp.maximum(h @ w2 + b2, 0.0)
    h = jnp.maximum(h @ w3 + b3, 0.0)
    h = jnp.maximum(h @ w4 + b4, 0.0)
    logits = h @ w5 + b5
    return jax.nn.softmax(logits, axis=1)


if __name__ == "__main__":
    NFEATURES = 16
    NHIDDEN = 32

    key = jax.random.PRNGKey(0)
    key, kx1, kx2 = jax.random.split(key, 3)
    params = init_params(key, NFEATURES, NHIDDEN, nclasses=2)

    # Small batch: exercises sublane padding and a single grid step.
    x_small = jax.random.normal(kx1, (6, NFEATURES), dtype=jnp.float32)
    # Larger batch: exercises tile selection + multi-step grid.
    x_big = jax.random.normal(kx2, (300, NFEATURES), dtype=jnp.float32)

    for x in (x_small, x_big):
        out = jax.block_until_ready(
            riiid_net_forward(x, params, nfeatures=NFEATURES))
        ref = riiid_net_reference(x, params, NFEATURES)
        assert out.shape == ref.shape, (out.shape, ref.shape)
        err = float(jnp.max(jnp.abs(out - ref)))
        # bf16 MXU operands + approx reciprocal -> relaxed tolerance vs f32 ref.
        assert err < 3e-2, f"max abs err = {err}"
        # Softmax rows sum to 1 (exact by construction: p0 = 1 - p1).
        assert jnp.allclose(jnp.sum(out, axis=1), 1.0, atol=1e-5)

    print("KERNEL_OK")
</pallas_src>

<mosaic_0001>
module attributes {stable_mosaic.version = 11 : i64} {
  func.func @riiid_kernel(%arg0: i32, %arg1: memref<8x16xf32, #tpu.memory_space<vmem>>, %arg2: memref<16x32xbf16, #tpu.memory_space<vmem>>, %arg3: memref<1x32xf32, #tpu.memory_space<vmem>>, %arg4: memref<32x32xbf16, #tpu.memory_space<vmem>>, %arg5: memref<1x32xf32, #tpu.memory_space<vmem>>, %arg6: memref<32x32xbf16, #tpu.memory_space<vmem>>, %arg7: memref<1x32xf32, #tpu.memory_space<vmem>>, %arg8: memref<32x32xbf16, #tpu.memory_space<vmem>>, %arg9: memref<1x32xf32, #tpu.memory_space<vmem>>, %arg10: memref<32x1xbf16, #tpu.memory_space<vmem>>, %arg11: memref<1x1xf32, #tpu.memory_space<vmem>>, %arg12: memref<8x2xf32, #tpu.memory_space<vmem>>) attributes {dimension_semantics = [#tpu.dimension_semantics<parallel>], iteration_bounds = array<i64: 1>, scalar_prefetch = 0 : i64, scratch_operands = 0 : i64, tpu.core_type = #tpu.core_type<tc>, window_params = [{transform_indices = @transform_0, window_bounds = array<i64: 8, 16>}, {pipeline_mode = #tpu.pipeline_mode<synchronous>, transform_indices = @transform_1, window_bounds = array<i64: 16, 32>}, {pipeline_mode = #tpu.pipeline_mode<synchronous>, transform_indices = @transform_2, window_bounds = array<i64: 1, 32>}, {pipeline_mode = #tpu.pipeline_mode<synchronous>, transform_indices = @transform_3, window_bounds = array<i64: 32, 32>}, {pipeline_mode = #tpu.pipeline_mode<synchronous>, transform_indices = @transform_4, window_bounds = array<i64: 1, 32>}, {pipeline_mode = #tpu.pipeline_mode<synchronous>, transform_indices = @transform_5, window_bounds = array<i64: 32, 32>}, {pipeline_mode = #tpu.pipeline_mode<synchronous>, transform_indices = @transform_6, window_bounds = array<i64: 1, 32>}, {pipeline_mode = #tpu.pipeline_mode<synchronous>, transform_indices = @transform_7, window_bounds = array<i64: 32, 32>}, {pipeline_mode = #tpu.pipeline_mode<synchronous>, transform_indices = @transform_8, window_bounds = array<i64: 1, 32>}, {pipeline_mode = #tpu.pipeline_mode<synchronous>, transform_indices = @transform_9, window_bounds = array<i64: 32, 1>}, {pipeline_mode = #tpu.pipeline_mode<synchronous>, transform_indices = @transform_10, window_bounds = array<i64: 1, 1>}, {transform_indices = @transform_11, window_bounds = array<i64: 8, 2>}]} {
    %c0 = arith.constant 0 : index
    %c0_0 = arith.constant 0 : index
    %0 = vector.load %arg1[%c0, %c0_0] : memref<8x16xf32, #tpu.memory_space<vmem>>, vector<8x16xf32>
    %1 = arith.truncf %0 : vector<8x16xf32> to vector<8x16xbf16>
    %c0_1 = arith.constant 0 : index
    %c0_2 = arith.constant 0 : index
    %2 = vector.load %arg2[%c0_1, %c0_2] : memref<16x32xbf16, #tpu.memory_space<vmem>>, vector<16x32xbf16>
    %cst = arith.constant dense<0.000000e+00> : vector<8x32xf32>
    %3 = tpu.matmul %1, %2, %cst {dimension_numbers = #tpu.dot_dimension_numbers<[1], [0], [0], [1], [0, 0, 1, 1], [], []>} : vector<8x16xbf16>, vector<16x32xbf16>, vector<8x32xf32> -> vector<8x32xf32>
    %c0_3 = arith.constant 0 : index
    %c0_4 = arith.constant 0 : index
    %4 = vector.load %arg3[%c0_3, %c0_4] : memref<1x32xf32, #tpu.memory_space<vmem>>, vector<1x32xf32>
    %5 = vector.broadcast %4 : vector<1x32xf32> to vector<8x32xf32>
    %6 = arith.addf %3, %5 : vector<8x32xf32>
    %cst_5 = arith.constant 0.000000e+00 : f32
    %7 = vector.broadcast %cst_5 : f32 to vector<8x32xf32>
    %8 = arith.maximumf %6, %7 : vector<8x32xf32>
    %9 = arith.truncf %8 : vector<8x32xf32> to vector<8x32xbf16>
    %c0_6 = arith.constant 0 : index
    %c0_7 = arith.constant 0 : index
    %10 = vector.load %arg4[%c0_6, %c0_7] : memref<32x32xbf16, #tpu.memory_space<vmem>>, vector<32x32xbf16>
    %cst_8 = arith.constant dense<0.000000e+00> : vector<8x32xf32>
    %11 = tpu.matmul %9, %10, %cst_8 {dimension_numbers = #tpu.dot_dimension_numbers<[1], [0], [0], [1], [0, 0, 1, 1], [], []>} : vector<8x32xbf16>, vector<32x32xbf16>, vector<8x32xf32> -> vector<8x32xf32>
    %c0_9 = arith.constant 0 : index
    %c0_10 = arith.constant 0 : index
    %12 = vector.load %arg5[%c0_9, %c0_10] : memref<1x32xf32, #tpu.memory_space<vmem>>, vector<1x32xf32>
    %13 = vector.broadcast %12 : vector<1x32xf32> to vector<8x32xf32>
    %14 = arith.addf %11, %13 : vector<8x32xf32>
    %cst_11 = arith.constant 0.000000e+00 : f32
    %15 = vector.broadcast %cst_11 : f32 to vector<8x32xf32>
    %16 = arith.maximumf %14, %15 : vector<8x32xf32>
    %17 = arith.truncf %16 : vector<8x32xf32> to vector<8x32xbf16>
    %c0_12 = arith.constant 0 : index
    %c0_13 = arith.constant 0 : index
    %18 = vector.load %arg6[%c0_12, %c0_13] : memref<32x32xbf16, #tpu.memory_space<vmem>>, vector<32x32xbf16>
    %cst_14 = arith.constant dense<0.000000e+00> : vector<8x32xf32>
    %19 = tpu.matmul %17, %18, %cst_14 {dimension_numbers = #tpu.dot_dimension_numbers<[1], [0], [0], [1], [0, 0, 1, 1], [], []>} : vector<8x32xbf16>, vector<32x32xbf16>, vector<8x32xf32> -> vector<8x32xf32>
    %c0_15 = arith.constant 0 : index
    %c0_16 = arith.constant 0 : index
    %20 = vector.load %arg7[%c0_15, %c0_16] : memref<1x32xf32, #tpu.memory_space<vmem>>, vector<1x32xf32>
    %21 = vector.broadcast %20 : vector<1x32xf32> to vector<8x32xf32>
    %22 = arith.addf %19, %21 : vector<8x32xf32>
    %cst_17 = arith.constant 0.000000e+00 : f32
    %23 = vector.broadcast %cst_17 : f32 to vector<8x32xf32>
    %24 = arith.maximumf %22, %23 : vector<8x32xf32>
    %25 = arith.truncf %24 : vector<8x32xf32> to vector<8x32xbf16>
    %c0_18 = arith.constant 0 : index
    %c0_19 = arith.constant 0 : index
    %26 = vector.load %arg8[%c0_18, %c0_19] : memref<32x32xbf16, #tpu.memory_space<vmem>>, vector<32x32xbf16>
    %cst_20 = arith.constant dense<0.000000e+00> : vector<8x32xf32>
    %27 = tpu.matmul %25, %26, %cst_20 {dimension_numbers = #tpu.dot_dimension_numbers<[1], [0], [0], [1], [0, 0, 1, 1], [], []>} : vector<8x32xbf16>, vector<32x32xbf16>, vector<8x32xf32> -> vector<8x32xf32>
    %c0_21 = arith.constant 0 : index
    %c0_22 = arith.constant 0 : index
    %28 = vector.load %arg9[%c0_21, %c0_22] : memref<1x32xf32, #tpu.memory_space<vmem>>, vector<1x32xf32>
    %29 = vector.broadcast %28 : vector<1x32xf32> to vector<8x32xf32>
    %30 = arith.addf %27, %29 : vector<8x32xf32>
    %cst_23 = arith.constant 0.000000e+00 : f32
    %31 = vector.broadcast %cst_23 : f32 to vector<8x32xf32>
    %32 = arith.maximumf %30, %31 : vector<8x32xf32>
    %33 = arith.truncf %32 : vector<8x32xf32> to vector<8x32xbf16>
    %c0_24 = arith.constant 0 : index
    %c0_25 = arith.constant 0 : index
    %34 = vector.load %arg10[%c0_24, %c0_25] : memref<32x1xbf16, #tpu.memory_space<vmem>>, vector<32x1xbf16>
    %cst_26 = arith.constant dense<0.000000e+00> : vector<8x1xf32>
    %35 = tpu.matmul %33, %34, %cst_26 {dimension_numbers = #tpu.dot_dimension_numbers<[1], [0], [0], [1], [0, 0, 1, 1], [], []>} : vector<8x32xbf16>, vector<32x1xbf16>, vector<8x1xf32> -> vector<8x1xf32>
    %c0_27 = arith.constant 0 : index
    %c0_28 = arith.constant 0 : index
    %36 = vector.load %arg11[%c0_27, %c0_28] : memref<1x1xf32, #tpu.memory_space<vmem>>, vector<1x1xf32>
    %37 = vector.broadcast %36 : vector<1x1xf32> to vector<8x1xf32>
    %38 = arith.addf %35, %37 : vector<8x1xf32>
    %cst_29 = arith.constant 0.000000e+00 : f32
    %39 = vector.broadcast %cst_29 : f32 to vector<8x1xf32>
    %40 = arith.subf %39, %38 : vector<8x1xf32>
    %41 = math.exp %40 : vector<8x1xf32>
    %cst_30 = arith.constant 1.000000e+00 : f32
    %42 = vector.broadcast %cst_30 : f32 to vector<8x1xf32>
    %43 = arith.addf %42, %41 : vector<8x1xf32>
    %44 = tpu.reciprocal %43 {approx = true} : vector<8x1xf32> -> vector<8x1xf32>
    %cst_31 = arith.constant 1.000000e+00 : f32
    %45 = vector.broadcast %cst_31 : f32 to vector<8x1xf32>
    %46 = arith.subf %45, %44 : vector<8x1xf32>
    %c0_32 = arith.constant 0 : index
    %c0_33 = arith.constant 0 : index
    %47 = vector.load %arg12[%c0_32, %c0_33] : memref<8x2xf32, #tpu.memory_space<vmem>>, vector<8x1xf32>
    tpu.vector_store %arg12[%c0_32, %c0_33], %46 {strides = array<i32>} : memref<8x2xf32, #tpu.memory_space<vmem>>, vector<8x1xf32>,
    %c0_34 = arith.constant 0 : index
    %c1 = arith.constant 1 : index
    %48 = vector.load %arg12[%c0_34, %c1] : memref<8x2xf32, #tpu.memory_space<vmem>>, vector<8x1xf32>
    tpu.vector_store %arg12[%c0_34, %c1], %44 {strides = array<i32>} : memref<8x2xf32, #tpu.memory_space<vmem>>, vector<8x1xf32>,
    return
  }
  func.func @transform_0(%arg0: i32) -> (i32, i32) {
    %c0_i32 = arith.constant 0 : i32
    %c0_i32_0 = arith.constant 0 : i32
    return %arg0, %c0_i32 : i32, i32
  }
  func.func @transform_1(%arg0: i32) -> (i32, i32) {
    %c0_i32 = arith.constant 0 : i32
    %c0_i32_0 = arith.constant 0 : i32
    %c0_i32_1 = arith.constant 0 : i32
    return %c0_i32, %c0_i32_0 : i32, i32
  }
  func.func @transform_2(%arg0: i32) -> (i32, i32) {
    %c0_i32 = arith.constant 0 : i32
    %c0_i32_0 = arith.constant 0 : i32
    %c0_i32_1 = arith.constant 0 : i32
    return %c0_i32, %c0_i32_0 : i32, i32
  }
  func.func @transform_3(%arg0: i32) -> (i32, i32) {
    %c0_i32 = arith.constant 0 : i32
    %c0_i32_0 = arith.constant 0 : i32
    %c0_i32_1 = arith.constant 0 : i32
    return %c0_i32, %c0_i32_0 : i32, i32
  }
  func.func @transform_4(%arg0: i32) -> (i32, i32) {
    %c0_i32 = arith.constant 0 : i32
    %c0_i32_0 = arith.constant 0 : i32
    %c0_i32_1 = arith.constant 0 : i32
    return %c0_i32, %c0_i32_0 : i32, i32
  }
  func.func @transform_5(%arg0: i32) -> (i32, i32) {
    %c0_i32 = arith.constant 0 : i32
    %c0_i32_0 = arith.constant 0 : i32
    %c0_i32_1 = arith.constant 0 : i32
    return %c0_i32, %c0_i32_0 : i32, i32
  }
  func.func @transform_6(%arg0: i32) -> (i32, i32) {
    %c0_i32 = arith.constant 0 : i32
    %c0_i32_0 = arith.constant 0 : i32
    %c0_i32_1 = arith.constant 0 : i32
    return %c0_i32, %c0_i32_0 : i32, i32
  }
  func.func @transform_7(%arg0: i32) -> (i32, i32) {
    %c0_i32 = arith.constant 0 : i32
    %c0_i32_0 = arith.constant 0 : i32
    %c0_i32_1 = arith.constant 0 : i32
    return %c0_i32, %c0_i32_0 : i32, i32
  }
  func.func @transform_8(%arg0: i32) -> (i32, i32) {
    %c0_i32 = arith.constant 0 : i32
    %c0_i32_0 = arith.constant 0 : i32
    %c0_i32_1 = arith.constant 0 : i32
    return %c0_i32, %c0_i32_0 : i32, i32
  }
  func.func @transform_9(%arg0: i32) -> (i32, i32) {
    %c0_i32 = arith.constant 0 : i32
    %c0_i32_0 = arith.constant 0 : i32
    %c0_i32_1 = arith.constant 0 : i32
    return %c0_i32, %c0_i32_0 : i32, i32
  }
  func.func @transform_10(%arg0: i32) -> (i32, i32) {
    %c0_i32 = arith.constant 0 : i32
    %c0_i32_0 = arith.constant 0 : i32
    %c0_i32_1 = arith.constant 0 : i32
    return %c0_i32, %c0_i32_0 : i32, i32
  }
  func.func @transform_11(%arg0: i32) -> (i32, i32) {
    %c0_i32 = arith.constant 0 : i32
    %c0_i32_0 = arith.constant 0 : i32
    return %arg0, %c0_i32 : i32, i32
  }
}

</mosaic_0001>

<llo_original>
// kernel: riiid_net_forward.1
$region0: #{riiid_net_forward.1}
  #allocation0 [shape = 'u32[]', space=smem, size = 0x4, offset = 0x4, fixed_abs, tag = 'smem constant byte address 0x4 - core index']
  #allocation1 [shape = 'u32[144,128]{1,0:T(1,128)}', space=vmem, size = 0x12000, scoped, tag = 'internal scratch']
  #allocation2 [shape = 'f32[1,1]{1,0:T(1,128)S(1)}', space=vmem, size = 0x200, scoped, tag = 'scoped memory for riiid_net_forward.1']
  %s0 = inlined_call_operand.vmem [shape: f32[8,16], index: 0, kind: input, shape index: {}]
  %s1 = inlined_call_operand.vmem [shape: bf16[16,32], index: 1, kind: input, shape index: {}]
  %s2 = inlined_call_operand.vmem [shape: f32[1,32], index: 2, kind: input, shape index: {}]
  %s3 = inlined_call_operand.vmem [shape: bf16[32,32], index: 3, kind: input, shape index: {}]
  %s4 = inlined_call_operand.vmem [shape: f32[1,32], index: 4, kind: input, shape index: {}]
  %s5 = inlined_call_operand.vmem [shape: bf16[32,32], index: 5, kind: input, shape index: {}]
  %s6 = inlined_call_operand.vmem [shape: f32[1,32], index: 6, kind: input, shape index: {}]
  %s7 = inlined_call_operand.vmem [shape: bf16[32,32], index: 7, kind: input, shape index: {}]
  %s8 = inlined_call_operand.vmem [shape: f32[1,32], index: 8, kind: input, shape index: {}]
  %s9 = inlined_call_operand.vmem [shape: bf16[32,1], index: 9, kind: input, shape index: {}]
  %s10 = inlined_call_operand.<no memory space> [shape: f32[1,1], index: 10, kind: input, shape index: {}]
  %s11 = inlined_call_operand.vmem [shape: f32[8,2], index: 11, kind: output, shape index: {}]
  %s12 = sld [smem:[#allocation0]]
  $region54: #{riiid_net_forward.1} parent=0
    _
  %s14 = ssub.s32 1, %s12
  %s15 = scalar_select 0, %s14, %s12
  %v16 = vstv %s10
  %17 = vst [vmem:[#allocation2] sm:$0x1] %v16
  // Predicated region
  $region2: #{riiid_net_forward.1} parent=0 // pred_check
    _
  $region3: #{riiid_net_forward.1} parent=0 // pred_check_branch
    %19 = sbr.rel (0) target = $region5
  $region4: #{riiid_net_forward.1} parent=0 // pred_region
    _
  $region5: #{riiid_net_forward.1} parent=0 // pred_fallthru
    _
  // Predicated region
  $region6: #{riiid_net_forward.1} parent=0 // pred_check
    _
  $region7: #{riiid_net_forward.1} parent=0 // pred_check_branch
    %21 = sbr.rel (0) target = $region9
  $region8: #{riiid_net_forward.1} parent=0 // pred_region
    _
  $region9: #{riiid_net_forward.1} parent=0 // pred_fallthru
    _
  // Predicated region
  $region10: #{riiid_net_forward.1} parent=0 // pred_check
    _
  $region11: #{riiid_net_forward.1} parent=0 // pred_check_branch
    %23 = sbr.rel (0) target = $region13
  $region12: #{riiid_net_forward.1} parent=0 // pred_region
    _
  $region13: #{riiid_net_forward.1} parent=0 // pred_fallthru
    _
  // Predicated region
  $region14: #{riiid_net_forward.1} parent=0 // pred_check
    _
  $region15: #{riiid_net_forward.1} parent=0 // pred_check_branch
    %25 = sbr.rel (0) target = $region17
  $region16: #{riiid_net_forward.1} parent=0 // pred_region
    _
  $region17: #{riiid_net_forward.1} parent=0 // pred_fallthru
    _
  // Predicated region
  $region18: #{riiid_net_forward.1} parent=0 // pred_check
    _
  $region19: #{riiid_net_forward.1} parent=0 // pred_check_branch
    %27 = sbr.rel (0) target = $region21
  $region20: #{riiid_net_forward.1} parent=0 // pred_region
    _
  $region21: #{riiid_net_forward.1} parent=0 // pred_fallthru
    _
  // Predicated region
  $region22: #{riiid_net_forward.1} parent=0 // pred_check
    _
  $region23: #{riiid_net_forward.1} parent=0 // pred_check_branch
    %29 = sbr.rel (0) target = $region25
  $region24: #{riiid_net_forward.1} parent=0 // pred_region
    _
  $region25: #{riiid_net_forward.1} parent=0 // pred_fallthru
    _
  // Predicated region
  $region26: #{riiid_net_forward.1} parent=0 // pred_check
    _
  $region27: #{riiid_net_forward.1} parent=0 // pred_check_branch
    %31 = sbr.rel (0) target = $region29
  $region28: #{riiid_net_forward.1} parent=0 // pred_region
    _
  $region29: #{riiid_net_forward.1} parent=0 // pred_fallthru
    _
  // Predicated region
  $region30: #{riiid_net_forward.1} parent=0 // pred_check
    _
  $region31: #{riiid_net_forward.1} parent=0 // pred_check_branch
    %33 = sbr.rel (0) target = $region33
  $region32: #{riiid_net_forward.1} parent=0 // pred_region
    _
  $region33: #{riiid_net_forward.1} parent=0 // pred_fallthru
    _
  // Predicated region
  $region34: #{riiid_net_forward.1} parent=0 // pred_check
    _
  $region35: #{riiid_net_forward.1} parent=0 // pred_check_branch
    %35 = sbr.rel (0) target = $region37
  $region36: #{riiid_net_forward.1} parent=0 // pred_region
    _
  $region37: #{riiid_net_forward.1} parent=0 // pred_fallthru
    _
  // Predicated region
  $region38: #{riiid_net_forward.1} parent=0 // pred_check
    _
  $region39: #{riiid_net_forward.1} parent=0 // pred_check_branch
    %37 = sbr.rel (0) target = $region41
  $region40: #{riiid_net_forward.1} parent=0 // pred_region
    _
  $region41: #{riiid_net_forward.1} parent=0 // pred_fallthru
    _
  // Predicated region
  $region42: #{riiid_net_forward.1} parent=0 // pred_check
    _
  $region43: #{riiid_net_forward.1} parent=0 // pred_check_branch
    %39 = sbr.rel (0) target = $region45
  $region44: #{riiid_net_forward.1} parent=0 // pred_region
    _
  $region45: #{riiid_net_forward.1} parent=0 // pred_fallthru
    _
  %v41 = vld [vmem:[%s0] sm:$0xff]
  %v42 = vpack.c.bf16 %v41, %v41
  %v43 = vld [vmem:[%s1] sm:$0xf]
  %v44 = vld [vmem:[%s1 + $0x4] sm:$0xf]
  %v45 = vld [vmem:[%s2] sm:$0x1]
  %v47 = vlaneseq
  %v48 = vshrl.u32 %v47, 7
  %v49 = vsub.s32 0, %v48
  %v50 = vrot.slane %v45, %v49
  %v54 = vunpack.c.l.b16 %v43
  %v55 = vunpack.c.l.b16 %v44
  %v56 = vpack.c.b16 %v55, %v54
  %vm58 = vcmask 130048
  %v60 = vsel %vm58, %v42, 0
  %62 = vmatprep.subr.bf16.mxu0 0
  %63 = vmatpush1.bf16.msra.mxu0 %v56
  %64 = vmatprep.subr.bf16.mxu0 0
  %65 = vmatpush1.bf16.msra.mxu0 0
  %66 = vmatprep.subr.bf16.mxu0 0
  %67 = vmatpush1.bf16.msra.mxu0 0
  %68 = vmatprep.subr.bf16.mxu0 0
  %69 = vmatpush1.bf16.msra.mxu0 0
  %70 = vmatprep.subr.bf16.mxu0 0
  %71 = vmatpush1.bf16.msra.mxu0 0
  %72 = vmatprep.subr.bf16.mxu0 0
  %73 = vmatpush1.bf16.msra.mxu0 0
  %74 = vmatprep.subr.bf16.mxu0 0
  %75 = vmatpush1.bf16.msra.mxu0 0
  %76 = vmatprep.subr.bf16.mxu0 0
  %77 = vmatpush1.bf16.msra.mxu0 0
  %78 = vmatprep.subr.bf16.mxu0 0
  %79 = vmatpush1.bf16.msra.mxu0 0
  %80 = vmatprep.subr.bf16.mxu0 0
  %81 = vmatpush1.bf16.msra.mxu0 0
  %82 = vmatprep.subr.bf16.mxu0 0
  %83 = vmatpush1.bf16.msra.mxu0 0
  %84 = vmatprep.subr.bf16.mxu0 0
  %85 = vmatpush1.bf16.msra.mxu0 0
  %86 = vmatprep.subr.bf16.mxu0 0
  %87 = vmatpush1.bf16.msra.mxu0 0
  %88 = vmatprep.subr.bf16.mxu0 0
  %89 = vmatpush1.bf16.msra.mxu0 0
  %90 = vmatprep.subr.bf16.mxu0 0
  %91 = vmatpush1.bf16.msra.mxu0 0
  %92 = vmatprep.subr.bf16.mxu0 0
  %93 = vmatpush1.bf16.msra.mxu0 0
  %94 = vmatprep.mubr.bf16.mxu0 0
  %95 = vmatmul.mubr.bf16.gmra.mrb[0].mxu0 %v60
  %v96 = vpop.f32.mrb[0].mxu0
  %v97 = vadd.f32 %v50, %v96
  %v98 = vpop.f32.mrb[0].mxu0
  %v99 = vpop.f32.mrb[0].mxu0
  %v100 = vpop.f32.mrb[0].mxu0
  %101 = vdwg.mxu0
  %v102 = vmax.f32 %v97, 0.0
  %v103 = vpack.c.bf16 %v102, %v102
  %v104 = vld [vmem:[%s3] sm:$0xf]
  %v105 = vld [vmem:[%s3 + $0x4] sm:$0xf]
  %v106 = vld [vmem:[%s3 + $0x8] sm:$0xf]
  %v107 = vld [vmem:[%s3 + $0xc] sm:$0xf]
  %v108 = vld [vmem:[%s4] sm:$0x1]
  %v110 = vlaneseq
  %v111 = vshrl.u32 %v110, 7
  %v112 = vsub.s32 0, %v111
  %v113 = vrot.slane %v108, %v112
  %v119 = vunpack.c.l.b16 %v104
  %v120 = vunpack.c.l.b16 %v105
  %v121 = vunpack.c.l.b16 %v106
  %v122 = vunpack.c.l.b16 %v107
  %v123 = vpack.c.b16 %v120, %v119
  %v124 = vpack.c.b16 %v122, %v121
  %vm127 = vcmask 261120
  %v129 = vsel %vm127, %v103, 0
  %131 = vmatprep.subr.bf16.mxu0 0
  %132 = vmatpush1.bf16.msra.mxu0 %v123
  %133 = vmatprep.subr.bf16.mxu0 0
  %134 = vmatpush1.bf16.msra.mxu0 %v124
  %135 = vmatprep.subr.bf16.mxu0 0
  %136 = vmatpush1.bf16.msra.mxu0 0
  %137 = vmatprep.subr.bf16.mxu0 0
  %138 = vmatpush1.bf16.msra.mxu0 0
  %139 = vmatprep.subr.bf16.mxu0 0
  %140 = vmatpush1.bf16.msra.mxu0 0
  %141 = vmatprep.subr.bf16.mxu0 0
  %142 = vmatpush1.bf16.msra.mxu0 0
  %143 = vmatprep.subr.bf16.mxu0 0
  %144 = vmatpush1.bf16.msra.mxu0 0
  %145 = vmatprep.subr.bf16.mxu0 0
  %146 = vmatpush1.bf16.msra.mxu0 0
  %147 = vmatprep.subr.bf16.mxu0 0
  %148 = vmatpush1.bf16.msra.mxu0 0
  %149 = vmatprep.subr.bf16.mxu0 0
  %150 = vmatpush1.bf16.msra.mxu0 0
  %151 = vmatprep.subr.bf16.mxu0 0
  %152 = vmatpush1.bf16.msra.mxu0 0
  %153 = vmatprep.subr.bf16.mxu0 0
  %154 = vmatpush1.bf16.msra.mxu0 0
  %155 = vmatprep.subr.bf16.mxu0 0
  %156 = vmatpush1.bf16.msra.mxu0 0
  %157 = vmatprep.subr.bf16.mxu0 0
  %158 = vmatpush1.bf16.msra.mxu0 0
  %159 = vmatprep.subr.bf16.mxu0 0
  %160 = vmatpush1.bf16.msra.mxu0 0
  %161 = vmatprep.subr.bf16.mxu0 0
  %162 = vmatpush1.bf16.msra.mxu0 0
  %163 = vmatprep.mubr.bf16.mxu0 0
  %164 = vmatmul.mubr.bf16.gmra.mrb[0].mxu0 %v129
  %v165 = vpop.f32.mrb[0].mxu0
  %v166 = vadd.f32 %v113, %v165
  %v167 = vpop.f32.mrb[0].mxu0
  %v168 = vpop.f32.mrb[0].mxu0
  %v169 = vpop.f32.mrb[0].mxu0
  %170 = vdwg.mxu0
  %v171 = vmax.f32 %v166, 0.0
  %v172 = vpack.c.bf16 %v171, %v171
  %v173 = vld [vmem:[%s5] sm:$0xf]
  %v174 = vld [vmem:[%s5 + $0x4] sm:$0xf]
  %v175 = vld [vmem:[%s5 + $0x8] sm:$0xf]
  %v176 = vld [vmem:[%s5 + $0xc] sm:$0xf]
  %v177 = vld [vmem:[%s6] sm:$0x1]
  %v179 = vlaneseq
  %v180 = vshrl.u32 %v179, 7
  %v181 = vsub.s32 0, %v180
  %v182 = vrot.slane %v177, %v181
  %v188 = vunpack.c.l.b16 %v173
  %v189 = vunpack.c.l.b16 %v174
  %v190 = vunpack.c.l.b16 %v175
  %v191 = vunpack.c.l.b16 %v176
  %v192 = vpack.c.b16 %v189, %v188
  %v193 = vpack.c.b16 %v191, %v190
  %v197 = vsel %vm127, %v172, 0
  %199 = vmatprep.subr.bf16.mxu0 0
  %200 = vmatpush1.bf16.msra.mxu0 %v192
  %201 = vmatprep.subr.bf16.mxu0 0
  %202 = vmatpush1.bf16.msra.mxu0 %v193
  %203 = vmatprep.subr.bf16.mxu0 0
  %204 = vmatpush1.bf16.msra.mxu0 0
  %205 = vmatprep.subr.bf16.mxu0 0
  %206 = vmatpush1.bf16.msra.mxu0 0
  %207 = vmatprep.subr.bf16.mxu0 0
  %208 = vmatpush1.bf16.msra.mxu0 0
  %209 = vmatprep.subr.bf16.mxu0 0
  %210 = vmatpush1.bf16.msra.mxu0 0
  %211 = vmatprep.subr.bf16.mxu0 0
  %212 = vmatpush1.bf16.msra.mxu0 0
  %213 = vmatprep.subr.bf16.mxu0 0
  %214 = vmatpush1.bf16.msra.mxu0 0
  %215 = vmatprep.subr.bf16.mxu0 0
  %216 = vmatpush1.bf16.msra.mxu0 0
  %217 = vmatprep.subr.bf16.mxu0 0
  %218 = vmatpush1.bf16.msra.mxu0 0
  %219 = vmatprep.subr.bf16.mxu0 0
  %220 = vmatpush1.bf16.msra.mxu0 0
  %221 = vmatprep.subr.bf16.mxu0 0
  %222 = vmatpush1.bf16.msra.mxu0 0
  %223 = vmatprep.subr.bf16.mxu0 0
  %224 = vmatpush1.bf16.msra.mxu0 0
  %225 = vmatprep.subr.bf16.mxu0 0
  %226 = vmatpush1.bf16.msra.mxu0 0
  %227 = vmatprep.subr.bf16.mxu0 0
  %228 = vmatpush1.bf16.msra.mxu0 0
  %229 = vmatprep.subr.bf16.mxu0 0
  %230 = vmatpush1.bf16.msra.mxu0 0
  %231 = vmatprep.mubr.bf16.mxu0 0
  %232 = vmatmul.mubr.bf16.gmra.mrb[0].mxu0 %v197
  %v233 = vpop.f32.mrb[0].mxu0
  %v234 = vadd.f32 %v182, %v233
  %v235 = vpop.f32.mrb[0].mxu0
  %v236 = vpop.f32.mrb[0].mxu0
  %v237 = vpop.f32.mrb[0].mxu0
  %238 = vdwg.mxu0
  %v239 = vmax.f32 %v234, 0.0
  %v240 = vpack.c.bf16 %v239, %v239
  %v241 = vld [vmem:[%s7] sm:$0xf]
  %v242 = vld [vmem:[%s7 + $0x4] sm:$0xf]
  %v243 = vld [vmem:[%s7 + $0x8] sm:$0xf]
  %v244 = vld [vmem:[%s7 + $0xc] sm:$0xf]
  %v245 = vld [vmem:[%s8] sm:$0x1]
  %v247 = vlaneseq
  %v248 = vshrl.u32 %v247, 7
  %v249 = vsub.s32 0, %v248
  %v250 = vrot.slane %v245, %v249
  %v256 = vunpack.c.l.b16 %v241
  %v257 = vunpack.c.l.b16 %v242
  %v258 = vunpack.c.l.b16 %v243
  %v259 = vunpack.c.l.b16 %v244
  %v260 = vpack.c.b16 %v257, %v256
  %v261 = vpack.c.b16 %v259, %v258
  %v265 = vsel %vm127, %v240, 0
  %267 = vmatprep.subr.bf16.mxu0 0
  %268 = vmatpush1.bf16.msra.mxu0 %v260
  %269 = vmatprep.subr.bf16.mxu0 0
  %270 = vmatpush1.bf16.msra.mxu0 %v261
  %271 = vmatprep.subr.bf16.mxu0 0
  %272 = vmatpush1.bf16.msra.mxu0 0
  %273 = vmatprep.subr.bf16.mxu0 0
  %274 = vmatpush1.bf16.msra.mxu0 0
  %275 = vmatprep.subr.bf16.mxu0 0
  %276 = vmatpush1.bf16.msra.mxu0 0
  %277 = vmatprep.subr.bf16.mxu0 0
  %278 = vmatpush1.bf16.msra.mxu0 0
  %279 = vmatprep.subr.bf16.mxu0 0
  %280 = vmatpush1.bf16.msra.mxu0 0
  %281 = vmatprep.subr.bf16.mxu0 0
  %282 = vmatpush1.bf16.msra.mxu0 0
  %283 = vmatprep.subr.bf16.mxu0 0
  %284 = vmatpush1.bf16.msra.mxu0 0
  %285 = vmatprep.subr.bf16.mxu0 0
  %286 = vmatpush1.bf16.msra.mxu0 0
  %287 = vmatprep.subr.bf16.mxu0 0
  %288 = vmatpush1.bf16.msra.mxu0 0
  %289 = vmatprep.subr.bf16.mxu0 0
  %290 = vmatpush1.bf16.msra.mxu0 0
  %291 = vmatprep.subr.bf16.mxu0 0
  %292 = vmatpush1.bf16.msra.mxu0 0
  %293 = vmatprep.subr.bf16.mxu0 0
  %294 = vmatpush1.bf16.msra.mxu0 0
  %295 = vmatprep.subr.bf16.mxu0 0
  %296 = vmatpush1.bf16.msra.mxu0 0
  %297 = vmatprep.subr.bf16.mxu0 0
  %298 = vmatpush1.bf16.msra.mxu0 0
  %299 = vmatprep.mubr.bf16.mxu0 0
  %300 = vmatmul.mubr.bf16.gmra.mrb[0].mxu0 %v265
  %v301 = vpop.f32.mrb[0].mxu0
  %v302 = vadd.f32 %v250, %v301
  %v303 = vpop.f32.mrb[0].mxu0
  %v304 = vpop.f32.mrb[0].mxu0
  %v305 = vpop.f32.mrb[0].mxu0
  %306 = vdwg.mxu0
  %v307 = vmax.f32 %v302, 0.0
  %v308 = vpack.c.bf16 %v307, %v307
  %v309 = vld [vmem:[%s9] sm:$0xf]
  %v310 = vld [vmem:[%s9 + $0x4] sm:$0xf]
  %v311 = vld [vmem:[%s9 + $0x8] sm:$0xf]
  %v312 = vld [vmem:[%s9 + $0xc] sm:$0xf]
  %v313 = vld [vmem:[#allocation2] sm:$0x1]
  %v315 = vlaneseq
  %v316 = vshrl.u32 %v315, 7
  %v317 = vsub.s32 0, %v316
  %v318 = vrot.slane %v313, %v317
  %v324 = vunpack.c.l.b16 %v309
  %v325 = vunpack.c.l.b16 %v310
  %v326 = vunpack.c.l.b16 %v311
  %v327 = vunpack.c.l.b16 %v312
  %v328 = vpack.c.b16 %v325, %v324
  %v329 = vpack.c.b16 %v327, %v326
  %v333 = vsel %vm127, %v308, 0
  %335 = vmatprep.subr.bf16.mxu0 0
  %336 = vmatpush1.bf16.msra.mxu0 %v328
  %337 = vmatprep.subr.bf16.mxu0 0
  %338 = vmatpush1.bf16.msra.mxu0 %v329
  %339 = vmatprep.subr.bf16.mxu0 0
  %340 = vmatpush1.bf16.msra.mxu0 0
  %341 = vmatprep.subr.bf16.mxu0 0
  %342 = vmatpush1.bf16.msra.mxu0 0
  %343 = vmatprep.subr.bf16.mxu0 0
  %344 = vmatpush1.bf16.msra.mxu0 0
  %345 = vmatprep.subr.bf16.mxu0 0
  %346 = vmatpush1.bf16.msra.mxu0 0
  %347 = vmatprep.subr.bf16.mxu0 0
  %348 = vmatpush1.bf16.msra.mxu0 0
  %349 = vmatprep.subr.bf16.mxu0 0
  %350 = vmatpush1.bf16.msra.mxu0 0
  %351 = vmatprep.subr.bf16.mxu0 0
  %352 = vmatpush1.bf16.msra.mxu0 0
  %353 = vmatprep.subr.bf16.mxu0 0
  %354 = vmatpush1.bf16.msra.mxu0 0
  %355 = vmatprep.subr.bf16.mxu0 0
  %356 = vmatpush1.bf16.msra.mxu0 0
  %357 = vmatprep.subr.bf16.mxu0 0
  %358 = vmatpush1.bf16.msra.mxu0 0
  %359 = vmatprep.subr.bf16.mxu0 0
  %360 = vmatpush1.bf16.msra.mxu0 0
  %361 = vmatprep.subr.bf16.mxu0 0
  %362 = vmatpush1.bf16.msra.mxu0 0
  %363 = vmatprep.subr.bf16.mxu0 0
  %364 = vmatpush1.bf16.msra.mxu0 0
  %365 = vmatprep.subr.bf16.mxu0 0
  %366 = vmatpush1.bf16.msra.mxu0 0
  %367 = vmatprep.mubr.bf16.mxu0 0
  %368 = vmatmul.mubr.bf16.gmra.mrb[0].mxu0 %v333
  %v369 = vpop.f32.mrb[0].mxu0
  %v370 = vadd.f32 %v318, %v369
  %v371 = vpop.f32.mrb[0].mxu0
  %v372 = vpop.f32.mrb[0].mxu0
  %v373 = vpop.f32.mrb[0].mxu0
  %374 = vdwg.mxu0
  %v375 = vsub.f32 0.0, %v370
  %v376 = vmul.f32 %v375, 1.442695
  %v377 = vpow.pop %v376
  %v378 = vadd.f32 %v377, 1.0
  %v379 = vrcp.pop %v378
  %v380 = vsub.f32 1.0, %v379
  %vm381 = vcmask 7168
  %382 = vst.msk [vmem:[%s11] sm:$0xff] %vm381, %v380
  %384 = vrot.lane.b32.xlu0 %v379, 1
  %v385 = vpop.permute.xlu0 %384
  %vm387 = vcmask 15368
  %388 = vst.msk [vmem:[%s11] sm:$0xff] %vm387, %v385
  // Predicated region
  $region46: #{riiid_net_forward.1} parent=0 // pred_check
    _
  $region47: #{riiid_net_forward.1} parent=0 // pred_check_branch
    %390 = sbr.rel (0) target = $region49
  $region48: #{riiid_net_forward.1} parent=0 // pred_region
    _
  $region49: #{riiid_net_forward.1} parent=0 // pred_fallthru
    _
  // Predicated region
  $region50: #{riiid_net_forward.1} parent=0 // pred_check
    _
  $region51: #{riiid_net_forward.1} parent=0 // pred_check_branch
    %392 = sbr.rel (0) target = $region53
  $region52: #{riiid_net_forward.1} parent=0 // pred_region
    _
  $region53: #{riiid_net_forward.1} parent=0 // pred_fallthru
    _

</llo_original>
